<compile_context>
chip_gen: v7x
topology: tpu7x:2x2x1
jax: 0.10.0
libtpu: 0.0.40
codegen_flags: <defaults>
</compile_context>

<pallas_src>
import jax
import jax.numpy as jnp
from jax.experimental import pallas as pl
from jax.experimental.pallas import tpu as pltpu


def block_kernel(xpad_ref, params_ref, pwbig_ref, out_ref):
    # xpad_ref  : (BT, H+2, (W+2)*Cin)  packed padded input, lane = w*Cin + c
    # params_ref: (10, W*Cin)           rows 0..8 = 3x3 depthwise taps with the
    #                                   BN scale folded in, row 9 = BN shift
    # pwbig_ref : (W*Cin, W*Cout)       block-diagonal 1x1-conv weight
    # out_ref   : (BT, H, W*Cout)       packed output, lane = w*Cout + o
    bt, hp2, wp2cin = xpad_ref.shape
    wcin = params_ref.shape[1]
    h = hp2 - 2
    cin = (wp2cin - wcin) // 2
    wcout = out_ref.shape[2]

    ys = []
    for b in range(bt):  # static, tiny
        # Depthwise 3x3 conv, stride 1: 9 shifted multiply-adds on lane-dense
        # (H, W*Cin) tiles.  kh -> sublane slice, kw -> static lane slice.
        acc = xpad_ref[b, 0:h, 0:wcin] * params_ref[0:1, :]
        for kh in range(3):
            for kw in range(3):
                if kh == 0 and kw == 0:
                    continue
                tap = xpad_ref[b, kh:kh + h, kw * cin:kw * cin + wcin]
                row = kh * 3 + kw
                acc = acc + tap * params_ref[row:row + 1, :]
        # BN1 (scale already folded into the taps) + ReLU1.
        ys.append(jnp.maximum(acc + params_ref[9:10, :], 0.0))
    y = ys[0] if bt == 1 else jnp.concatenate(ys, axis=0)    # (BT*H, W*Cin)

    # Pointwise 1x1 conv as one MXU matmul against the block-diagonal weight,
    # then ReLU2 on the lane-dense (W*Cout wide) result.
    o = jnp.dot(y, pwbig_ref[...], preferred_element_type=jnp.float32)
    out_ref[...] = jnp.maximum(o, 0.0).reshape(bt, h, wcout)


def _pick_batch_tile(n, per_image_bytes):
    """Single-TC chips (<= v6): collapse the batch into one grid step (the
    ~0.35us per-step overhead dominates a tiny kernel and one larger matmul
    fills more MXU rows).  Multi-TC chips (v7x): keep grid=(N,) parallel so
    both TensorCores get work."""
    try:
        kind = jax.devices()[0].device_kind.lower()
    except Exception:
        return 1
    if "v7" in kind:
        return 1
    if n * per_image_bytes > (8 << 20):   # keep the block comfortably in VMEM
        return 1
    return n


def block_forward(x_nchw, dw_oihw, bn_gamma, bn_beta, bn_mean, bn_var, pw_oihw,
                  eps=1e-5):
    """x_nchw: (N, Cin, H, W) float32. Returns (N, Cout, H, W) float32."""
    n, cin, h, w = x_nchw.shape
    cout = pw_oihw.shape[0]

    # ---- glue: layout + padding + weight prep (plain JAX, outside kernel) ----
    x_nhwc = jnp.transpose(x_nchw, (0, 2, 3, 1))                   # NHWC
    x_pad = jnp.pad(x_nhwc, ((0, 0), (1, 1), (1, 1), (0, 0)))      # same pad
    x_packed = x_pad.reshape(n, h + 2, (w + 2) * cin)              # lane-dense

    scale = bn_gamma / jnp.sqrt(bn_var + eps)
    shift = bn_beta - bn_mean * scale
    # depthwise weight (Cin,1,3,3) -> (3,3,Cin), fold BN scale, pack to lanes
    dw = jnp.transpose(dw_oihw[:, 0, :, :], (1, 2, 0))
    dw_folded = (dw * scale).reshape(9, cin)
    params = jnp.concatenate(
        [jnp.tile(dw_folded, (1, w)),                              # rows 0..8
         jnp.tile(shift.reshape(1, cin), (1, w))], axis=0)         # row 9
    # pointwise weight (Cout,Cin,1,1) -> (Cin,Cout) -> block-diagonal
    pw = jnp.transpose(pw_oihw[:, :, 0, 0], (1, 0))
    pw_big = jnp.kron(jnp.eye(w, dtype=pw.dtype), pw)              # (WCin,WCout)

    per_image_bytes = ((h + 2) * (w + 2) * cin + h * w * cout) * 4
    bt = _pick_batch_tile(n, per_image_bytes)
    grid = (n // bt,)

    out_packed = pl.pallas_call(
        block_kernel,
        out_shape=jax.ShapeDtypeStruct((n, h, w * cout), jnp.float32),
        grid=grid,
        in_specs=[
            pl.BlockSpec((bt, h + 2, (w + 2) * cin), lambda i: (i, 0, 0)),
            pl.BlockSpec((10, w * cin), lambda i: (0, 0)),
            pl.BlockSpec((w * cin, w * cout), lambda i: (0, 0)),
        ],
        out_specs=pl.BlockSpec((bt, h, w * cout), lambda i: (i, 0, 0)),
        compiler_params=pltpu.CompilerParams(
            dimension_semantics=("parallel",)),
    )(x_packed, params, pw_big)

    out_nhwc = out_packed.reshape(n, h, w, cout)                   # free reshape
    return jnp.transpose(out_nhwc, (0, 3, 1, 2))                   # NCHW


def reference_forward(x_nchw, dw_oihw, bn_gamma, bn_beta, bn_mean, bn_var,
                      pw_oihw, eps=1e-5):
    """Pure-JAX reference mirroring the PyTorch module (eval-mode BN)."""
    cin = x_nchw.shape[1]
    y = jax.lax.conv_general_dilated(
        x_nchw, dw_oihw, window_strides=(1, 1), padding=((1, 1), (1, 1)),
        dimension_numbers=("NCHW", "OIHW", "NCHW"), feature_group_count=cin)
    scale = bn_gamma / jnp.sqrt(bn_var + eps)
    shift = bn_beta - bn_mean * scale
    y = y * scale[None, :, None, None] + shift[None, :, None, None]
    y = jnp.maximum(y, 0.0)
    y = jax.lax.conv_general_dilated(
        y, pw_oihw, window_strides=(1, 1), padding="VALID",
        dimension_numbers=("NCHW", "OIHW", "NCHW"))
    return jnp.maximum(y, 0.0)


if __name__ == "__main__":
    # Block(in_planes=4, out_planes=8, kernel_size=3, stride=1,
    #       same_padding=True, bn=False)
    N, CIN, COUT, H, W = 2, 4, 8, 16, 16

    key = jax.random.PRNGKey(0)
    kx, kdw, kpw, kg, kb, km, kv = jax.random.split(key, 7)

    x = jax.random.normal(kx, (N, CIN, H, W), jnp.float32)
    # conv1.weight: (in_planes, 1, 3, 3), groups=in_planes, no bias
    dw_w = jax.random.normal(kdw, (CIN, 1, 3, 3), jnp.float32) * 0.3
    # conv2.weight: (out_planes, in_planes, 1, 1), no bias
    pw_w = jax.random.normal(kpw, (COUT, CIN, 1, 1), jnp.float32) * 0.3
    # bn1 parameters / running stats (deterministic, inference mode)
    bn_gamma = 1.0 + 0.1 * jax.random.normal(kg, (CIN,), jnp.float32)
    bn_beta = 0.1 * jax.random.normal(kb, (CIN,), jnp.float32)
    bn_mean = 0.1 * jax.random.normal(km, (CIN,), jnp.float32)
    bn_var = jnp.abs(1.0 + 0.1 * jax.random.normal(kv, (CIN,), jnp.float32))

    out = block_forward(x, dw_w, bn_gamma, bn_beta, bn_mean, bn_var, pw_w)
    out = jax.block_until_ready(out)

    ref = reference_forward(x, dw_w, bn_gamma, bn_beta, bn_mean, bn_var, pw_w)
    ref = jax.block_until_ready(ref)

    assert out.shape == (N, COUT, H, W), out.shape
    assert jnp.allclose(out, ref, atol=1e-4, rtol=1e-4), (
        float(jnp.max(jnp.abs(out - ref))))
    print("KERNEL_OK")
</pallas_src>

<mosaic_0001>
module attributes {stable_mosaic.version = 11 : i64} {
  func.func @block_kernel(%arg0: i32, %arg1: memref<2x18x72xf32, #tpu.memory_space<vmem>>, %arg2: memref<10x64xf32, #tpu.memory_space<vmem>>, %arg3: memref<64x128xf32, #tpu.memory_space<vmem>>, %arg4: memref<2x16x128xf32, #tpu.memory_space<vmem>>) attributes {dimension_semantics = [#tpu.dimension_semantics<parallel>], iteration_bounds = array<i64: 1>, scalar_prefetch = 0 : i64, scratch_operands = 0 : i64, tpu.core_type = #tpu.core_type<tc>, window_params = [{transform_indices = @transform_0, window_bounds = array<i64: 2, 18, 72>}, {pipeline_mode = #tpu.pipeline_mode<synchronous>, transform_indices = @transform_1, window_bounds = array<i64: 10, 64>}, {pipeline_mode = #tpu.pipeline_mode<synchronous>, transform_indices = @transform_2, window_bounds = array<i64: 64, 128>}, {transform_indices = @transform_3, window_bounds = array<i64: 2, 16, 128>}]} {
    %c0 = arith.constant 0 : index
    %c0_0 = arith.constant 0 : index
    %c0_1 = arith.constant 0 : index
    %0 = vector.load %arg1[%c0, %c0_0, %c0_1] : memref<2x18x72xf32, #tpu.memory_space<vmem>>, vector<1x16x64xf32>
    %1 = vector.shape_cast %0 : vector<1x16x64xf32> to vector<16x64xf32>
    %c0_2 = arith.constant 0 : index
    %c0_3 = arith.constant 0 : index
    %2 = vector.load %arg2[%c0_2, %c0_3] : memref<10x64xf32, #tpu.memory_space<vmem>>, vector<1x64xf32>
    %3 = vector.broadcast %2 : vector<1x64xf32> to vector<16x64xf32>
    %4 = arith.mulf %1, %3 : vector<16x64xf32>
    %c0_4 = arith.constant 0 : index
    %c0_5 = arith.constant 0 : index
    %c4 = arith.constant 4 : index
    %5 = vector.load %arg1[%c0_4, %c0_5, %c4] : memref<2x18x72xf32, #tpu.memory_space<vmem>>, vector<1x16x64xf32>
    %6 = vector.shape_cast %5 : vector<1x16x64xf32> to vector<16x64xf32>
    %c1 = arith.constant 1 : index
    %c0_6 = arith.constant 0 : index
    %7 = vector.load %arg2[%c1, %c0_6] : memref<10x64xf32, #tpu.memory_space<vmem>>, vector<1x64xf32>
    %8 = vector.broadcast %7 : vector<1x64xf32> to vector<16x64xf32>
    %9 = arith.mulf %6, %8 : vector<16x64xf32>
    %10 = arith.addf %4, %9 : vector<16x64xf32>
    %c0_7 = arith.constant 0 : index
    %c0_8 = arith.constant 0 : index
    %c8 = arith.constant 8 : index
    %11 = vector.load %arg1[%c0_7, %c0_8, %c8] : memref<2x18x72xf32, #tpu.memory_space<vmem>>, vector<1x16x64xf32>
    %12 = vector.shape_cast %11 : vector<1x16x64xf32> to vector<16x64xf32>
    %c2 = arith.constant 2 : index
    %c0_9 = arith.constant 0 : index
    %13 = vector.load %arg2[%c2, %c0_9] : memref<10x64xf32, #tpu.memory_space<vmem>>, vector<1x64xf32>
    %14 = vector.broadcast %13 : vector<1x64xf32> to vector<16x64xf32>
    %15 = arith.mulf %12, %14 : vector<16x64xf32>
    %16 = arith.addf %10, %15 : vector<16x64xf32>
    %c0_10 = arith.constant 0 : index
    %c1_11 = arith.constant 1 : index
    %c0_12 = arith.constant 0 : index
    %17 = vector.load %arg1[%c0_10, %c1_11, %c0_12] : memref<2x18x72xf32, #tpu.memory_space<vmem>>, vector<1x16x64xf32>
    %18 = vector.shape_cast %17 : vector<1x16x64xf32> to vector<16x64xf32>
    %c3 = arith.constant 3 : index
    %c0_13 = arith.constant 0 : index
    %19 = vector.load %arg2[%c3, %c0_13] : memref<10x64xf32, #tpu.memory_space<vmem>>, vector<1x64xf32>
    %20 = vector.broadcast %19 : vector<1x64xf32> to vector<16x64xf32>
    %21 = arith.mulf %18, %20 : vector<16x64xf32>
    %22 = arith.addf %16, %21 : vector<16x64xf32>
    %c0_14 = arith.constant 0 : index
    %c1_15 = arith.constant 1 : index
    %c4_16 = arith.constant 4 : index
    %23 = vector.load %arg1[%c0_14, %c1_15, %c4_16] : memref<2x18x72xf32, #tpu.memory_space<vmem>>, vector<1x16x64xf32>
    %24 = vector.shape_cast %23 : vector<1x16x64xf32> to vector<16x64xf32>
    %c4_17 = arith.constant 4 : index
    %c0_18 = arith.constant 0 : index
    %25 = vector.load %arg2[%c4_17, %c0_18] : memref<10x64xf32, #tpu.memory_space<vmem>>, vector<1x64xf32>
    %26 = vector.broadcast %25 : vector<1x64xf32> to vector<16x64xf32>
    %27 = arith.mulf %24, %26 : vector<16x64xf32>
    %28 = arith.addf %22, %27 : vector<16x64xf32>
    %c0_19 = arith.constant 0 : index
    %c1_20 = arith.constant 1 : index
    %c8_21 = arith.constant 8 : index
    %29 = vector.load %arg1[%c0_19, %c1_20, %c8_21] : memref<2x18x72xf32, #tpu.memory_space<vmem>>, vector<1x16x64xf32>
    %30 = vector.shape_cast %29 : vector<1x16x64xf32> to vector<16x64xf32>
    %c5 = arith.constant 5 : index
    %c0_22 = arith.constant 0 : index
    %31 = vector.load %arg2[%c5, %c0_22] : memref<10x64xf32, #tpu.memory_space<vmem>>, vector<1x64xf32>
    %32 = vector.broadcast %31 : vector<1x64xf32> to vector<16x64xf32>
    %33 = arith.mulf %30, %32 : vector<16x64xf32>
    %34 = arith.addf %28, %33 : vector<16x64xf32>
    %c0_23 = arith.constant 0 : index
    %c2_24 = arith.constant 2 : index
    %c0_25 = arith.constant 0 : index
    %35 = vector.load %arg1[%c0_23, %c2_24, %c0_25] : memref<2x18x72xf32, #tpu.memory_space<vmem>>, vector<1x16x64xf32>
    %36 = vector.shape_cast %35 : vector<1x16x64xf32> to vector<16x64xf32>
    %c6 = arith.constant 6 : index
    %c0_26 = arith.constant 0 : index
    %37 = vector.load %arg2[%c6, %c0_26] : memref<10x64xf32, #tpu.memory_space<vmem>>, vector<1x64xf32>
    %38 = vector.broadcast %37 : vector<1x64xf32> to vector<16x64xf32>
    %39 = arith.mulf %36, %38 : vector<16x64xf32>
    %40 = arith.addf %34, %39 : vector<16x64xf32>
    %c0_27 = arith.constant 0 : index
    %c2_28 = arith.constant 2 : index
    %c4_29 = arith.constant 4 : index
    %41 = vector.load %arg1[%c0_27, %c2_28, %c4_29] : memref<2x18x72xf32, #tpu.memory_space<vmem>>, vector<1x16x64xf32>
    %42 = vector.shape_cast %41 : vector<1x16x64xf32> to vector<16x64xf32>
    %c7 = arith.constant 7 : index
    %c0_30 = arith.constant 0 : index
    %43 = vector.load %arg2[%c7, %c0_30] : memref<10x64xf32, #tpu.memory_space<vmem>>, vector<1x64xf32>
    %44 = vector.broadcast %43 : vector<1x64xf32> to vector<16x64xf32>
    %45 = arith.mulf %42, %44 : vector<16x64xf32>
    %46 = arith.addf %40, %45 : vector<16x64xf32>
    %c0_31 = arith.constant 0 : index
    %c2_32 = arith.constant 2 : index
    %c8_33 = arith.constant 8 : index
    %47 = vector.load %arg1[%c0_31, %c2_32, %c8_33] : memref<2x18x72xf32, #tpu.memory_space<vmem>>, vector<1x16x64xf32>
    %48 = vector.shape_cast %47 : vector<1x16x64xf32> to vector<16x64xf32>
    %c8_34 = arith.constant 8 : index
    %c0_35 = arith.constant 0 : index
    %49 = vector.load %arg2[%c8_34, %c0_35] : memref<10x64xf32, #tpu.memory_space<vmem>>, vector<1x64xf32>
    %50 = vector.broadcast %49 : vector<1x64xf32> to vector<16x64xf32>
    %51 = arith.mulf %48, %50 : vector<16x64xf32>
    %52 = arith.addf %46, %51 : vector<16x64xf32>
    %c9 = arith.constant 9 : index
    %c0_36 = arith.constant 0 : index
    %53 = vector.load %arg2[%c9, %c0_36] : memref<10x64xf32, #tpu.memory_space<vmem>>, vector<1x64xf32>
    %54 = vector.broadcast %53 : vector<1x64xf32> to vector<16x64xf32>
    %55 = arith.addf %52, %54 : vector<16x64xf32>
    %cst = arith.constant 0.000000e+00 : f32
    %56 = vector.broadcast %cst : f32 to vector<16x64xf32>
    %57 = arith.maximumf %55, %56 : vector<16x64xf32>
    %c1_37 = arith.constant 1 : index
    %c0_38 = arith.constant 0 : index
    %c0_39 = arith.constant 0 : index
    %58 = vector.load %arg1[%c1_37, %c0_38, %c0_39] : memref<2x18x72xf32, #tpu.memory_space<vmem>>, vector<1x16x64xf32>
    %59 = vector.shape_cast %58 : vector<1x16x64xf32> to vector<16x64xf32>
    %c0_40 = arith.constant 0 : index
    %c0_41 = arith.constant 0 : index
    %60 = vector.load %arg2[%c0_40, %c0_41] : memref<10x64xf32, #tpu.memory_space<vmem>>, vector<1x64xf32>
    %61 = vector.broadcast %60 : vector<1x64xf32> to vector<16x64xf32>
    %62 = arith.mulf %59, %61 : vector<16x64xf32>
    %c1_42 = arith.constant 1 : index
    %c0_43 = arith.constant 0 : index
    %c4_44 = arith.constant 4 : index
    %63 = vector.load %arg1[%c1_42, %c0_43, %c4_44] : memref<2x18x72xf32, #tpu.memory_space<vmem>>, vector<1x16x64xf32>
    %64 = vector.shape_cast %63 : vector<1x16x64xf32> to vector<16x64xf32>
    %c1_45 = arith.constant 1 : index
    %c0_46 = arith.constant 0 : index
    %65 = vector.load %arg2[%c1_45, %c0_46] : memref<10x64xf32, #tpu.memory_space<vmem>>, vector<1x64xf32>
    %66 = vector.broadcast %65 : vector<1x64xf32> to vector<16x64xf32>
    %67 = arith.mulf %64, %66 : vector<16x64xf32>
    %68 = arith.addf %62, %67 : vector<16x64xf32>
    %c1_47 = arith.constant 1 : index
    %c0_48 = arith.constant 0 : index
    %c8_49 = arith.constant 8 : index
    %69 = vector.load %arg1[%c1_47, %c0_48, %c8_49] : memref<2x18x72xf32, #tpu.memory_space<vmem>>, vector<1x16x64xf32>
    %70 = vector.shape_cast %69 : vector<1x16x64xf32> to vector<16x64xf32>
    %c2_50 = arith.constant 2 : index
    %c0_51 = arith.constant 0 : index
    %71 = vector.load %arg2[%c2_50, %c0_51] : memref<10x64xf32, #tpu.memory_space<vmem>>, vector<1x64xf32>
    %72 = vector.broadcast %71 : vector<1x64xf32> to vector<16x64xf32>
    %73 = arith.mulf %70, %72 : vector<16x64xf32>
    %74 = arith.addf %68, %73 : vector<16x64xf32>
    %c1_52 = arith.constant 1 : index
    %c1_53 = arith.constant 1 : index
    %c0_54 = arith.constant 0 : index
    %75 = vector.load %arg1[%c1_52, %c1_53, %c0_54] : memref<2x18x72xf32, #tpu.memory_space<vmem>>, vector<1x16x64xf32>
    %76 = vector.shape_cast %75 : vector<1x16x64xf32> to vector<16x64xf32>
    %c3_55 = arith.constant 3 : index
    %c0_56 = arith.constant 0 : index
    %77 = vector.load %arg2[%c3_55, %c0_56] : memref<10x64xf32, #tpu.memory_space<vmem>>, vector<1x64xf32>
    %78 = vector.broadcast %77 : vector<1x64xf32> to vector<16x64xf32>
    %79 = arith.mulf %76, %78 : vector<16x64xf32>
    %80 = arith.addf %74, %79 : vector<16x64xf32>
    %c1_57 = arith.constant 1 : index
    %c1_58 = arith.constant 1 : index
    %c4_59 = arith.constant 4 : index
    %81 = vector.load %arg1[%c1_57, %c1_58, %c4_59] : memref<2x18x72xf32, #tpu.memory_space<vmem>>, vector<1x16x64xf32>
    %82 = vector.shape_cast %81 : vector<1x16x64xf32> to vector<16x64xf32>
    %c4_60 = arith.constant 4 : index
    %c0_61 = arith.constant 0 : index
    %83 = vector.load %arg2[%c4_60, %c0_61] : memref<10x64xf32, #tpu.memory_space<vmem>>, vector<1x64xf32>
    %84 = vector.broadcast %83 : vector<1x64xf32> to vector<16x64xf32>
    %85 = arith.mulf %82, %84 : vector<16x64xf32>
    %86 = arith.addf %80, %85 : vector<16x64xf32>
    %c1_62 = arith.constant 1 : index
    %c1_63 = arith.constant 1 : index
    %c8_64 = arith.constant 8 : index
    %87 = vector.load %arg1[%c1_62, %c1_63, %c8_64] : memref<2x18x72xf32, #tpu.memory_space<vmem>>, vector<1x16x64xf32>
    %88 = vector.shape_cast %87 : vector<1x16x64xf32> to vector<16x64xf32>
    %c5_65 = arith.constant 5 : index
    %c0_66 = arith.constant 0 : index
    %89 = vector.load %arg2[%c5_65, %c0_66] : memref<10x64xf32, #tpu.memory_space<vmem>>, vector<1x64xf32>
    %90 = vector.broadcast %89 : vector<1x64xf32> to vector<16x64xf32>
    %91 = arith.mulf %88, %90 : vector<16x64xf32>
    %92 = arith.addf %86, %91 : vector<16x64xf32>
    %c1_67 = arith.constant 1 : index
    %c2_68 = arith.constant 2 : index
    %c0_69 = arith.constant 0 : index
    %93 = vector.load %arg1[%c1_67, %c2_68, %c0_69] : memref<2x18x72xf32, #tpu.memory_space<vmem>>, vector<1x16x64xf32>
    %94 = vector.shape_cast %93 : vector<1x16x64xf32> to vector<16x64xf32>
    %c6_70 = arith.constant 6 : index
    %c0_71 = arith.constant 0 : index
    %95 = vector.load %arg2[%c6_70, %c0_71] : memref<10x64xf32, #tpu.memory_space<vmem>>, vector<1x64xf32>
    %96 = vector.broadcast %95 : vector<1x64xf32> to vector<16x64xf32>
    %97 = arith.mulf %94, %96 : vector<16x64xf32>
    %98 = arith.addf %92, %97 : vector<16x64xf32>
    %c1_72 = arith.constant 1 : index
    %c2_73 = arith.constant 2 : index
    %c4_74 = arith.constant 4 : index
    %99 = vector.load %arg1[%c1_72, %c2_73, %c4_74] : memref<2x18x72xf32, #tpu.memory_space<vmem>>, vector<1x16x64xf32>
    %100 = vector.shape_cast %99 : vector<1x16x64xf32> to vector<16x64xf32>
    %c7_75 = arith.constant 7 : index
    %c0_76 = arith.constant 0 : index
    %101 = vector.load %arg2[%c7_75, %c0_76] : memref<10x64xf32, #tpu.memory_space<vmem>>, vector<1x64xf32>
    %102 = vector.broadcast %101 : vector<1x64xf32> to vector<16x64xf32>
    %103 = arith.mulf %100, %102 : vector<16x64xf32>
    %104 = arith.addf %98, %103 : vector<16x64xf32>
    %c1_77 = arith.constant 1 : index
    %c2_78 = arith.constant 2 : index
    %c8_79 = arith.constant 8 : index
    %105 = vector.load %arg1[%c1_77, %c2_78, %c8_79] : memref<2x18x72xf32, #tpu.memory_space<vmem>>, vector<1x16x64xf32>
    %106 = vector.shape_cast %105 : vector<1x16x64xf32> to vector<16x64xf32>
    %c8_80 = arith.constant 8 : index
    %c0_81 = arith.constant 0 : index
    %107 = vector.load %arg2[%c8_80, %c0_81] : memref<10x64xf32, #tpu.memory_space<vmem>>, vector<1x64xf32>
    %108 = vector.broadcast %107 : vector<1x64xf32> to vector<16x64xf32>
    %109 = arith.mulf %106, %108 : vector<16x64xf32>
    %110 = arith.addf %104, %109 : vector<16x64xf32>
    %c9_82 = arith.constant 9 : index
    %c0_83 = arith.constant 0 : index
    %111 = vector.load %arg2[%c9_82, %c0_83] : memref<10x64xf32, #tpu.memory_space<vmem>>, vector<1x64xf32>
    %112 = vector.broadcast %111 : vector<1x64xf32> to vector<16x64xf32>
    %113 = arith.addf %110, %112 : vector<16x64xf32>
    %cst_84 = arith.constant 0.000000e+00 : f32
    %114 = vector.broadcast %cst_84 : f32 to vector<16x64xf32>
    %115 = arith.maximumf %113, %114 : vector<16x64xf32>
    %116 = tpu.concatenate %57, %115 in 0 : vector<16x64xf32>, vector<16x64xf32> -> vector<32x64xf32>
    %c0_85 = arith.constant 0 : index
    %c0_86 = arith.constant 0 : index
    %117 = vector.load %arg3[%c0_85, %c0_86] : memref<64x128xf32, #tpu.memory_space<vmem>>, vector<64x128xf32>
    %cst_87 = arith.constant dense<0.000000e+00> : vector<32x128xf32>
    %118 = tpu.matmul %116, %117, %cst_87 {dimension_numbers = #tpu.dot_dimension_numbers<[1], [0], [0], [1], [0, 0, 1, 1], [], []>} : vector<32x64xf32>, vector<64x128xf32>, vector<32x128xf32> -> vector<32x128xf32>
    %cst_88 = arith.constant 0.000000e+00 : f32
    %119 = vector.broadcast %cst_88 : f32 to vector<32x128xf32>
    %120 = arith.maximumf %118, %119 : vector<32x128xf32>
    %121 = vector.shape_cast %120 : vector<32x128xf32> to vector<2x16x128xf32>
    %c0_89 = arith.constant 0 : index
    %c0_90 = arith.constant 0 : index
    %c0_91 = arith.constant 0 : index
    %122 = vector.load %arg4[%c0_89, %c0_90, %c0_91] : memref<2x16x128xf32, #tpu.memory_space<vmem>>, vector<2x16x128xf32>
    tpu.vector_store %arg4[%c0_89, %c0_90, %c0_91], %121 {strides = array<i32>} : memref<2x16x128xf32, #tpu.memory_space<vmem>>, vector<2x16x128xf32>,
    return
  }
  func.func @transform_0(%arg0: i32) -> (i32, i32, i32) {
    %c0_i32 = arith.constant 0 : i32
    %c0_i32_0 = arith.constant 0 : i32
    %c0_i32_1 = arith.constant 0 : i32
    return %arg0, %c0_i32, %c0_i32_0 : i32, i32, i32
  }
  func.func @transform_1(%arg0: i32) -> (i32, i32) {
    %c0_i32 = arith.constant 0 : i32
    %c0_i32_0 = arith.constant 0 : i32
    %c0_i32_1 = arith.constant 0 : i32
    return %c0_i32, %c0_i32_0 : i32, i32
  }
  func.func @transform_2(%arg0: i32) -> (i32, i32) {
    %c0_i32 = arith.constant 0 : i32
    %c0_i32_0 = arith.constant 0 : i32
    %c0_i32_1 = arith.constant 0 : i32
    return %c0_i32, %c0_i32_0 : i32, i32
  }
  func.func @transform_3(%arg0: i32) -> (i32, i32, i32) {
    %c0_i32 = arith.constant 0 : i32
    %c0_i32_0 = arith.constant 0 : i32
    %c0_i32_1 = arith.constant 0 : i32
    return %arg0, %c0_i32, %c0_i32_0 : i32, i32, i32
  }
}

</mosaic_0001>

<llo_original>
// kernel: tpu_custom_call.1
$region0: #{tpu_custom_call.1}
  #allocation0 [shape = 'u32[]', space=smem, size = 0x4, offset = 0x4, fixed_abs, tag = 'smem constant byte address 0x4 - core index']
  #allocation1 [shape = 'u32[144,128]{1,0:T(1,128)}', space=vmem, size = 0x12000, scoped, tag = 'internal scratch']
  %s0 = inlined_call_operand.vmem [shape: f32[2,18,72], index: 0, kind: input, shape index: {}]
  %s1 = inlined_call_operand.vmem [shape: f32[10,64], index: 1, kind: input, shape index: {}]
  %s2 = inlined_call_operand.vmem [shape: f32[64,128], index: 2, kind: input, shape index: {}]
  %s3 = inlined_call_operand.hbm [shape: f32[2,16,128], index: 3, kind: output, shape index: {}]
  %s4 = sld [smem:[#allocation0]]
  $region22: #{tpu_custom_call.1} parent=0
    _
  %s6 = ssub.s32 1, %s4
  %s7 = scalar_select 0, %s6, %s4
  $region1: #{tpu_custom_call.1} parent=0
    #allocation2 [shape = 'u8[16384]{0}', space=vmem, size = 0x4000, scoped, tag = 'output window, operand 0, single buffered']
    #allocation3 [shape = 's32[1]{0}', space=sflag, size = 0x4, scoped, tag = 'scoped memory for tpu_custom_call.1']
    %8 = vsyncpa [#allocation3], 0
    // Predicated region
    $region2: #{tpu_custom_call.1} parent=1 // pred_check
      _
    $region3: #{tpu_custom_call.1} parent=1 // pred_check_branch
      %10 = sbr.rel (0) target = $region5
    $region4: #{tpu_custom_call.1} parent=1 // pred_region
      _
    $region5: #{tpu_custom_call.1} parent=1 // pred_fallthru
      _
    // Predicated region
    $region6: #{tpu_custom_call.1} parent=1 // pred_check
      _
    $region7: #{tpu_custom_call.1} parent=1 // pred_check_branch
      %12 = sbr.rel (0) target = $region9
    $region8: #{tpu_custom_call.1} parent=1 // pred_region
      _
    $region9: #{tpu_custom_call.1} parent=1 // pred_fallthru
      _
    // Predicated region
    $region10: #{tpu_custom_call.1} parent=1 // pred_check
      _
    $region11: #{tpu_custom_call.1} parent=1 // pred_check_branch
      %14 = sbr.rel (0) target = $region13
    $region12: #{tpu_custom_call.1} parent=1 // pred_region
      _
    $region13: #{tpu_custom_call.1} parent=1 // pred_fallthru
      _
    %v15 = vld [vmem:[%s0] sm:$0xff]
    %v16 = vld [vmem:[%s0 + $0x8] sm:$0xff]
    %v17 = vld [vmem:[%s1] sm:$0x1]
    %v18 = vlaneseq
    %v19 = vshrl.u32 %v18, 7
    %v20 = vsub.s32 0, %v19
    %v21 = vrot.slane %v17, %v20
    %v22 = vmul.f32 %v15, %v21
    %v23 = vmul.f32 %v16, %v21
    %v24 = vld [vmem:[%s1 + $0x1] sm:$0x1]
    %v25 = vlaneseq
    %v26 = vshrl.u32 %v25, 7
    %v27 = vsub.s32 0, %v26
    %v28 = vrot.slane %v24, %v27
    %30 = vrot.lane.b32.xlu0 %v28, 4
    %v31 = vpop.permute.xlu0 %30
    %v33 = vmul.f32 %v15, %v31
    %v34 = vmul.f32 %v16, %v31
    %37 = vrot.lane.b32.xlu0 %v33, 124
    %v38 = vpop.permute.xlu0 %37
    %39 = vrot.lane.b32.xlu0 %v34, 124
    %v40 = vpop.permute.xlu0 %39
    %v43 = vadd.f32 %v22, %v38
    %v44 = vadd.f32 %v23, %v40
    %v45 = vld [vmem:[%s1 + $0x2] sm:$0x1]
    %v46 = vlaneseq
    %v47 = vshrl.u32 %v46, 7
    %v48 = vsub.s32 0, %v47
    %v49 = vrot.slane %v45, %v48
    %51 = vrot.lane.b32.xlu0 %v49, 8
    %v52 = vpop.permute.xlu0 %51
    %v54 = vmul.f32 %v15, %v52
    %v55 = vmul.f32 %v16, %v52
    %58 = vrot.lane.b32.xlu0 %v54, 120
    %v59 = vpop.permute.xlu0 %58
    %60 = vrot.lane.b32.xlu0 %v55, 120
    %v61 = vpop.permute.xlu0 %60
    %v64 = vadd.f32 %v43, %v59
    %v65 = vadd.f32 %v44, %v61
    %v66 = vld [vmem:[%s0 + $0x1] sm:$0xff]
    %v67 = vld [vmem:[%s0 + $0x9] sm:$0xff]
    %v68 = vld [vmem:[%s1 + $0x3] sm:$0x1]
    %v69 = vlaneseq
    %v70 = vshrl.u32 %v69, 7
    %v71 = vsub.s32 0, %v70
    %v72 = vrot.slane %v68, %v71
    %v73 = vmul.f32 %v66, %v72
    %v74 = vmul.f32 %v67, %v72
    %v75 = vadd.f32 %v64, %v73
    %v76 = vadd.f32 %v65, %v74
    %v77 = vld [vmem:[%s1 + $0x4] sm:$0x1]
    %v78 = vlaneseq
    %v79 = vshrl.u32 %v78, 7
    %v80 = vsub.s32 0, %v79
    %v81 = vrot.slane %v77, %v80
    %83 = vrot.lane.b32.xlu0 %v81, 4
    %v84 = vpop.permute.xlu0 %83
    %v86 = vmul.f32 %v66, %v84
    %v87 = vmul.f32 %v67, %v84
    %90 = vrot.lane.b32.xlu0 %v86, 124
    %v91 = vpop.permute.xlu0 %90
    %92 = vrot.lane.b32.xlu0 %v87, 124
    %v93 = vpop.permute.xlu0 %92
    %v96 = vadd.f32 %v75, %v91
    %v97 = vadd.f32 %v76, %v93
    %v98 = vld [vmem:[%s1 + $0x5] sm:$0x1]
    %v99 = vlaneseq
    %v100 = vshrl.u32 %v99, 7
    %v101 = vsub.s32 0, %v100
    %v102 = vrot.slane %v98, %v101
    %104 = vrot.lane.b32.xlu0 %v102, 8
    %v105 = vpop.permute.xlu0 %104
    %v107 = vmul.f32 %v66, %v105
    %v108 = vmul.f32 %v67, %v105
    %111 = vrot.lane.b32.xlu0 %v107, 120
    %v112 = vpop.permute.xlu0 %111
    %113 = vrot.lane.b32.xlu0 %v108, 120
    %v114 = vpop.permute.xlu0 %113
    %v117 = vadd.f32 %v96, %v112
    %v118 = vadd.f32 %v97, %v114
    %v119 = vld [vmem:[%s0 + $0x2] sm:$0xff]
    %v120 = vld [vmem:[%s0 + $0xa] sm:$0xff]
    %v121 = vld [vmem:[%s1 + $0x6] sm:$0x1]
    %v122 = vlaneseq
    %v123 = vshrl.u32 %v122, 7
    %v124 = vsub.s32 0, %v123
    %v125 = vrot.slane %v121, %v124
    %v126 = vmul.f32 %v119, %v125
    %v127 = vmul.f32 %v120, %v125
    %v128 = vadd.f32 %v117, %v126
    %v129 = vadd.f32 %v118, %v127
    %v130 = vld [vmem:[%s1 + $0x7] sm:$0x1]
    %v131 = vlaneseq
    %v132 = vshrl.u32 %v131, 7
    %v133 = vsub.s32 0, %v132
    %v134 = vrot.slane %v130, %v133
    %136 = vrot.lane.b32.xlu0 %v134, 4
    %v137 = vpop.permute.xlu0 %136
    %v139 = vmul.f32 %v119, %v137
    %v140 = vmul.f32 %v120, %v137
    %143 = vrot.lane.b32.xlu0 %v139, 124
    %v144 = vpop.permute.xlu0 %143
    %145 = vrot.lane.b32.xlu0 %v140, 124
    %v146 = vpop.permute.xlu0 %145
    %v149 = vadd.f32 %v128, %v144
    %v150 = vadd.f32 %v129, %v146
    %v151 = vld [vmem:[%s1 + $0x8] sm:$0x1]
    %v152 = vlaneseq
    %v153 = vshrl.u32 %v152, 7
    %v154 = vsub.s32 0, %v153
    %v155 = vrot.slane %v151, %v154
    %157 = vrot.lane.b32.xlu0 %v155, 8
    %v158 = vpop.permute.xlu0 %157
    %v160 = vmul.f32 %v119, %v158
    %v161 = vmul.f32 %v120, %v158
    %164 = vrot.lane.b32.xlu0 %v160, 120
    %v165 = vpop.permute.xlu0 %164
    %166 = vrot.lane.b32.xlu0 %v161, 120
    %v167 = vpop.permute.xlu0 %166
    %v170 = vadd.f32 %v149, %v165
    %v171 = vadd.f32 %v150, %v167
    %v172 = vld [vmem:[%s1 + $0x9] sm:$0x1]
    %v173 = vlaneseq
    %v174 = vshrl.u32 %v173, 7
    %v175 = vsub.s32 0, %v174
    %v176 = vrot.slane %v172, %v175
    %v177 = vadd.f32 %v170, %v176
    %v178 = vadd.f32 %v171, %v176
    %v179 = vmax.f32 %v177, 0.0
    %v180 = vmax.f32 %v178, 0.0
    %s181 = scalar_lea.vmem %s0, 24
    %v182 = vld [vmem:[%s181] sm:$0xff]
    %v183 = vld [vmem:[%s181 + $0x8] sm:$0xff]
    %v184 = vmul.f32 %v182, %v21
    %v185 = vmul.f32 %v183, %v21
    %v186 = vmul.f32 %v182, %v31
    %v187 = vmul.f32 %v183, %v31
    %190 = vrot.lane.b32.xlu0 %v186, 124
    %v191 = vpop.permute.xlu0 %190
    %192 = vrot.lane.b32.xlu0 %v187, 124
    %v193 = vpop.permute.xlu0 %192
    %v196 = vadd.f32 %v184, %v191
    %v197 = vadd.f32 %v185, %v193
    %v198 = vmul.f32 %v182, %v52
    %v199 = vmul.f32 %v183, %v52
    %202 = vrot.lane.b32.xlu0 %v198, 120
    %v203 = vpop.permute.xlu0 %202
    %204 = vrot.lane.b32.xlu0 %v199, 120
    %v205 = vpop.permute.xlu0 %204
    %v208 = vadd.f32 %v196, %v203
    %v209 = vadd.f32 %v197, %v205
    %v210 = vld [vmem:[%s181 + $0x1] sm:$0xff]
    %v211 = vld [vmem:[%s181 + $0x9] sm:$0xff]
    %v212 = vmul.f32 %v210, %v72
    %v213 = vmul.f32 %v211, %v72
    %v214 = vadd.f32 %v208, %v212
    %v215 = vadd.f32 %v209, %v213
    %v216 = vmul.f32 %v210, %v84
    %v217 = vmul.f32 %v211, %v84
    %220 = vrot.lane.b32.xlu0 %v216, 124
    %v221 = vpop.permute.xlu0 %220
    %222 = vrot.lane.b32.xlu0 %v217, 124
    %v223 = vpop.permute.xlu0 %222
    %v226 = vadd.f32 %v214, %v221
    %v227 = vadd.f32 %v215, %v223
    %v228 = vmul.f32 %v210, %v105
    %v229 = vmul.f32 %v211, %v105
    %232 = vrot.lane.b32.xlu0 %v228, 120
    %v233 = vpop.permute.xlu0 %232
    %234 = vrot.lane.b32.xlu0 %v229, 120
    %v235 = vpop.permute.xlu0 %234
    %v238 = vadd.f32 %v226, %v233
    %v239 = vadd.f32 %v227, %v235
    %v240 = vld [vmem:[%s181 + $0x2] sm:$0xff]
    %v241 = vld [vmem:[%s181 + $0xa] sm:$0xff]
    %v242 = vmul.f32 %v240, %v125
    %v243 = vmul.f32 %v241, %v125
    %v244 = vadd.f32 %v238, %v242
    %v245 = vadd.f32 %v239, %v243
    %v246 = vmul.f32 %v240, %v137
    %v247 = vmul.f32 %v241, %v137
    %250 = vrot.lane.b32.xlu0 %v246, 124
    %v251 = vpop.permute.xlu0 %250
    %252 = vrot.lane.b32.xlu0 %v247, 124
    %v253 = vpop.permute.xlu0 %252
    %v256 = vadd.f32 %v244, %v251
    %v257 = vadd.f32 %v245, %v253
    %v258 = vmul.f32 %v240, %v158
    %v259 = vmul.f32 %v241, %v158
    %262 = vrot.lane.b32.xlu0 %v258, 120
    %v263 = vpop.permute.xlu0 %262
    %264 = vrot.lane.b32.xlu0 %v259, 120
    %v265 = vpop.permute.xlu0 %264
    %v268 = vadd.f32 %v256, %v263
    %v269 = vadd.f32 %v257, %v265
    %v270 = vadd.f32 %v268, %v176
    %v271 = vadd.f32 %v269, %v176
    %v272 = vmax.f32 %v270, 0.0
    %v273 = vmax.f32 %v271, 0.0
    %v274 = vld [vmem:[%s2] sm:$0xff]
    %v275 = vld [vmem:[%s2 + $0x8] sm:$0xff]
    %v276 = vld [vmem:[%s2 + $0x10] sm:$0xff]
    %v277 = vld [vmem:[%s2 + $0x18] sm:$0xff]
    %v278 = vld [vmem:[%s2 + $0x20] sm:$0xff]
    %v279 = vld [vmem:[%s2 + $0x28] sm:$0xff]
    %v280 = vld [vmem:[%s2 + $0x30] sm:$0xff]
    %v281 = vld [vmem:[%s2 + $0x38] sm:$0xff]
    %vm282 = vcmask 523264
    %v284 = vsel %vm282, %v179, 0
    %v287 = vsel %vm282, %v180, 0
    %v290 = vsel %vm282, %v272, 0
    %v293 = vsel %vm282, %v273, 0
    %295 = vmatprep.subr.mxu0 0.0
    %296 = vmatpush1.msra.mxu0 %v274
    %297 = vmatprep.subr.mxu0 0.0
    %298 = vmatpush1.msra.mxu0 %v275
    %299 = vmatprep.subr.mxu0 0.0
    %300 = vmatpush1.msra.mxu0 %v276
    %301 = vmatprep.subr.mxu0 0.0
    %302 = vmatpush1.msra.mxu0 %v277
    %303 = vmatprep.subr.mxu0 0.0
    %304 = vmatpush1.msra.mxu0 %v278
    %305 = vmatprep.subr.mxu0 0.0
    %306 = vmatpush1.msra.mxu0 %v279
    %307 = vmatprep.subr.mxu0 0.0
    %308 = vmatpush1.msra.mxu0 %v280
    %309 = vmatprep.subr.mxu0 0.0
    %310 = vmatpush1.msra.mxu0 %v281
    %311 = vmatprep.subr.mxu0 0.0
    %312 = vmatpush1.msra.mxu0 0.0
    %313 = vmatprep.subr.mxu0 0.0
    %314 = vmatpush1.msra.mxu0 0.0
    %315 = vmatprep.subr.mxu0 0.0
    %316 = vmatpush1.msra.mxu0 0.0
    %317 = vmatprep.subr.mxu0 0.0
    %318 = vmatpush1.msra.mxu0 0.0
    %319 = vmatprep.subr.mxu0 0.0
    %320 = vmatpush1.msra.mxu0 0.0
    %321 = vmatprep.subr.mxu0 0.0
    %322 = vmatpush1.msra.mxu0 0.0
    %323 = vmatprep.subr.mxu0 0.0
    %324 = vmatpush1.msra.mxu0 0.0
    %325 = vmatprep.subr.mxu0 0.0
    %326 = vmatpush1.msra.mxu0 0.0
    %327 = vmatprep.subr.mxu0 0.0
    %328 = vmatpush1.msra.mxu0 0.0
    %329 = vmatprep.subr.mxu0 0.0
    %330 = vmatpush1.msra.mxu0 0.0
    %331 = vmatprep.subr.mxu0 0.0
    %332 = vmatpush1.msra.mxu0 0.0
    %333 = vmatprep.subr.mxu0 0.0
    %334 = vmatpush1.msra.mxu0 0.0
    %335 = vmatprep.subr.mxu0 0.0
    %336 = vmatpush1.msra.mxu0 0.0
    %337 = vmatprep.subr.mxu0 0.0
    %338 = vmatpush1.msra.mxu0 0.0
    %339 = vmatprep.subr.mxu0 0.0
    %340 = vmatpush1.msra.mxu0 0.0
    %341 = vmatprep.subr.mxu0 0.0
    %342 = vmatpush1.msra.mxu0 0.0
    %343 = vmatprep.subr.mxu0 0.0
    %344 = vmatpush1.msra.mxu0 0.0
    %345 = vmatprep.subr.mxu0 0.0
    %346 = vmatpush1.msra.mxu0 0.0
    %347 = vmatprep.subr.mxu0 0.0
    %348 = vmatpush1.msra.mxu0 0.0
    %349 = vmatprep.subr.mxu0 0.0
    %350 = vmatpush1.msra.mxu0 0.0
    %351 = vmatprep.subr.mxu0 0.0
    %352 = vmatpush1.msra.mxu0 0.0
    %353 = vmatprep.subr.mxu0 0.0
    %354 = vmatpush1.msra.mxu0 0.0
    %355 = vmatprep.subr.mxu0 0.0
    %356 = vmatpush1.msra.mxu0 0.0
    %357 = vmatprep.subr.mxu0 0.0
    %358 = vmatpush1.msra.mxu0 0.0
    %359 = vmatprep.mubr.f32.mxu0 0.0
    %360 = vmatmul.mubr.f32.gmra.mrb[0].mxu0 %v284
    %v361 = vpop.f32.mrb[0].mxu0
    %v362 = vadd.f32 0.0, %v361
    %v363 = vpop.f32.mrb[0].mxu0
    %364 = vmatprep.mubr.f32.mxu0 0.0
    %365 = vmatmul.mubr.f32.gmra.mrb[0].mxu0 %v287
    %v366 = vpop.f32.mrb[0].mxu0
    %v367 = vadd.f32 0.0, %v366
    %v368 = vpop.f32.mrb[0].mxu0
    %369 = vmatprep.mubr.f32.mxu0 0.0
    %370 = vmatmul.mubr.f32.gmra.mrb[0].mxu0 %v290
    %v371 = vpop.f32.mrb[0].mxu0
    %v372 = vadd.f32 0.0, %v371
    %v373 = vpop.f32.mrb[0].mxu0
    %374 = vmatprep.mubr.f32.mxu0 0.0
    %375 = vmatmul.mubr.f32.gmra.mrb[0].mxu0 %v293
    %v376 = vpop.f32.mrb[0].mxu0
    %v377 = vadd.f32 0.0, %v376
    %v378 = vpop.f32.mrb[0].mxu0
    %379 = vdwg.mxu0
    %v380 = vmax.f32 %v362, 0.0
    %v381 = vmax.f32 %v367, 0.0
    %v382 = vmax.f32 %v372, 0.0
    %v383 = vmax.f32 %v377, 0.0
    %384 = vst [vmem:[#allocation2] sm:$0xff] %v380
    %385 = vst [vmem:[#allocation2 + $0x8] sm:$0xff] %v381
    %386 = vst [vmem:[#allocation2 + $0x10] sm:$0xff] %v382
    %387 = vst [vmem:[#allocation2 + $0x18] sm:$0xff] %v383
    // Predicated region
    $region14: #{tpu_custom_call.1} parent=1 // pred_check
      _
    $region15: #{tpu_custom_call.1} parent=1 // pred_check_branch
      %389 = sbr.rel (0) target = $region17
    $region16: #{tpu_custom_call.1} parent=1 // pred_region
      %s391 = ssub.s32 512, 512
      %392 = vsyncadd [#allocation3], %s391
      %s393 = sshll.u32 [#allocation2], 4
      %s394 = int_to_ptr.vmem [resolvable:$true] %s393
      %399 = dma.vmem_to_hbm [thread:$0]  %s394, 512, %s3, [#allocation3], 128, 128, 8
    $region17: #{tpu_custom_call.1} parent=1 // pred_fallthru
      _
    // Predicated region
    $region18: #{tpu_custom_call.1} parent=1 // pred_check
      _
    $region19: #{tpu_custom_call.1} parent=1 // pred_check_branch
      %401 = sbr.rel (0) target = $region21
    $region20: #{tpu_custom_call.1} parent=1 // pred_region
      %402 = dma.done [#allocation3], 512
    $region21: #{tpu_custom_call.1} parent=1 // pred_fallthru
      _
    %403 = vsyncpa [#allocation3], 1

</llo_original>
